<compile_context>
chip_gen: v6e
topology: v6e:2x2x1
jax: 0.10.0
libtpu: 0.0.40
codegen_flags: <defaults>
</compile_context>

<pallas_src>
import functools

import jax
import jax.numpy as jnp
from jax.experimental import pallas as pl
from jax.experimental.pallas import tpu as pltpu

NUM_CLASSES = 5        # CFG.num_classes
SMOOTHING = 0.2        # CFG.smoothing
TAYLOR_N = 2           # TaylorSoftmax order (n=2 -> fn = 1 + x + x^2/2 >= 0.5)

LANES = 128
# 128K examples/tile: ~2.5 MiB f32 logits block (double-buffered ~6 MiB total with
# labels) -> amortizes the ~0.35us/step overhead to ~85-90% of HBM roofline while
# staying well inside v7x's 64 MiB per-TC VMEM.  Sweep 64K-256K if tuning further.
DEFAULT_EXAMPLES_PER_TILE = 128 * 1024


def _round_up(x, m):
    return (x + m - 1) // m * m


def _taylor_ce_kernel(logits_ref, labels_ref, out_ref, *, batch_size, tile_r):
    # logits_ref: (C, tile_r, 128)  native dtype (cast to f32 in-kernel)
    # labels_ref: (tile_r, 128)     integer class ids
    # out_ref:    (1, 1, 128)       f32 lane-wise partial sums for this tile
    step = pl.program_id(0)
    last = pl.num_programs(0) - 1

    x = logits_ref[...].astype(jnp.float32)               # (C, tile_r, 128)
    # Taylor-softmax numerator, Horner form: fn = 1 + x*(1 + x/2) >= 0.5.
    fn = 1.0 + x * (1.0 + 0.5 * x)

    labels = labels_ref[...].astype(jnp.int32)             # (tile_r, 128)

    # Block-wise over dense per-class planes: denominator S, product of fn over
    # classes, and fn at the target class (no (B, C) true_dist materialization).
    s = fn[0]
    prod = fn[0]
    f_label = fn[0]          # out-of-range labels fall back to class 0 (as before)
    for c in range(1, NUM_CLASSES):
        fc = fn[c]
        s = s + fc
        prod = prod * fc
        f_label = jnp.where(labels == c, fc, f_label)

    confidence = 1.0 - SMOOTHING
    off_value = SMOOTHING / (NUM_CLASSES - 1)
    # loss_b = sum_c -true_dist_c * (log fn_c - log S)
    #        = log S - off*log(prod_c fn_c) - (conf - off)*log(fn_label)
    # Single log of the 5-term product (3 EUP logs/example): fn >= 0.5 so no underflow,
    # and the product only overflows f32 for |logits| >~ 1e4 (assumed bounded upstream).
    per_example = (jnp.log(s)
                   - off_value * jnp.log(prod)
                   - (confidence - off_value) * jnp.log(f_label))   # (tile_r, 128)

    @pl.when(step != last)
    def _steady():
        # Interior tiles are always fully valid -> no masking work in steady state.
        out_ref[...] = jnp.sum(per_example, axis=0, keepdims=True)[None]

    @pl.when(step == last)
    def _tail():
        # Only the last tile can contain zero-padded examples (>= B) or stale rows
        # from a partial Pallas block; mask with a true select (never multiply, so
        # NaN/inf in masked lanes cannot propagate).
        row = jax.lax.broadcasted_iota(jnp.int32, per_example.shape, 0)
        lane = jax.lax.broadcasted_iota(jnp.int32, per_example.shape, 1)
        ex = (step * tile_r + row) * LANES + lane
        masked = jnp.where(ex < batch_size, per_example, 0.0)
        out_ref[...] = jnp.sum(masked, axis=0, keepdims=True)[None]


def taylor_cross_entropy_loss(logits, labels, *,
                              examples_per_tile=DEFAULT_EXAMPLES_PER_TILE,
                              class_major=False):
    """Taylor-softmax (n=2) cross entropy with label smoothing, mean over the batch.

    logits: (B, C) float — or (C, B) when class_major=True (preferred: avoids an
            extra HBM transpose pass).
    labels: (B,) integer class ids (int8/int16/int32 pass through untouched).
    Returns a float32 scalar.
    """
    if class_major:
        C, B = logits.shape
        lg = logits
    else:
        B, C = logits.shape
        # TODO(synk): have the producer emit class-major (C, B) logits (e.g. swap the
        # final projection's matmul operands) and call with class_major=True; this
        # standalone transpose re-reads/writes the whole logits array in HBM.
        lg = jnp.transpose(logits, (1, 0))
    assert C == NUM_CLASSES
    assert TAYLOR_N == 2  # kernel hard-codes the order-2 Taylor polynomial

    if labels.dtype not in (jnp.int8, jnp.int16, jnp.int32):
        labels = labels.astype(jnp.int32)

    # Pad the example axis to a multiple of 128 lanes (only when ragged); padded
    # logits are zeros and padded examples are masked out in the last tile.
    b_pad = _round_up(B, LANES)
    if b_pad != B:
        lg = jnp.pad(lg, ((0, 0), (0, b_pad - B)))
        labels = jnp.pad(labels, ((0, b_pad - B),))
    r_pad = b_pad // LANES

    # Free, contiguity-preserving reshapes: (C, B_pad) -> (C, rows, 128) and
    # (B_pad,) -> (rows, 128) so in-kernel vregs are fully dense.
    lg3 = lg.reshape(C, r_pad, LANES)
    lab2 = labels.reshape(r_pad, LANES)

    req_r = max(1, int(examples_per_tile) // LANES)
    if r_pad <= req_r or r_pad <= 8:
        tile_r = r_pad                       # single block / full extent
    else:
        tile_r = max(8, (req_r // 8) * 8)    # (8,128) block constraint
    grid = (pl.cdiv(r_pad, tile_r),)
    num_tiles = grid[0]

    kernel = functools.partial(_taylor_ce_kernel, batch_size=B, tile_r=tile_r)

    # Explicit scoped-VMEM budget: double-buffered input blocks + in-kernel f32 temps.
    lg_block = C * tile_r * LANES * lg3.dtype.itemsize
    lab_block = tile_r * LANES * lab2.dtype.itemsize
    f32_block = C * tile_r * LANES * 4
    vmem_limit = int(min(100 * 2**20,
                         max(16 * 2**20, 2 * (lg_block + lab_block) + 6 * f32_block)))

    cost = pl.CostEstimate(
        flops=45 * B,
        transcendentals=3 * B,
        bytes_accessed=int(B * C * lg3.dtype.itemsize
                           + B * lab2.dtype.itemsize
                           + num_tiles * LANES * 4),
    )

    partials = pl.pallas_call(
        kernel,
        out_shape=jax.ShapeDtypeStruct((num_tiles, 1, LANES), jnp.float32),
        grid_spec=pltpu.PrefetchScalarGridSpec(
            num_scalar_prefetch=0,
            grid=grid,
            in_specs=[
                pl.BlockSpec((NUM_CLASSES, tile_r, LANES), lambda i: (0, i, 0)),
                pl.BlockSpec((tile_r, LANES), lambda i: (i, 0)),
            ],
            out_specs=pl.BlockSpec((1, 1, LANES), lambda i: (i, 0, 0)),
        ),
        compiler_params=pltpu.CompilerParams(
            dimension_semantics=("parallel",),      # per-tile partial sums -> both v7x TCs
            vmem_limit_bytes=vmem_limit),
        cost_estimate=cost,
    )(lg3, lab2)

    # Tiny final reduction (num_tiles * 128 partials) + mean normalisation.
    return jnp.sum(partials) * (1.0 / B)


def _reference(logits, labels):
    # Pure-JAX reference of the PyTorch forward (for sanity check).
    x = logits.astype(jnp.float32)
    fn = 1.0 + x + 0.5 * x * x
    probs = fn / jnp.sum(fn, axis=1, keepdims=True)
    log_probs = jnp.log(probs)
    confidence = 1.0 - SMOOTHING
    off_value = SMOOTHING / (NUM_CLASSES - 1)
    true_dist = jnp.full_like(log_probs, off_value)
    true_dist = true_dist.at[jnp.arange(x.shape[0]), labels].set(confidence)
    return jnp.mean(jnp.sum(-true_dist * log_probs, axis=1))


if __name__ == "__main__":
    key = jax.random.PRNGKey(0)
    k1, k2, k3, k4 = jax.random.split(key, 4)

    # Case 1: CFG.batch_size rows (B=32) -> single zero-padded, lane-masked tile.
    B1 = 32
    logits1 = 3.0 * jax.random.normal(k1, (B1, NUM_CLASSES), dtype=jnp.float32)
    labels1 = jax.random.randint(k2, (B1,), 0, NUM_CLASSES, dtype=jnp.int32)
    loss1 = jax.block_until_ready(taylor_cross_entropy_loss(logits1, labels1))
    ref1 = _reference(logits1, labels1)
    assert jnp.allclose(loss1, ref1, atol=1e-5, rtol=1e-4), (loss1, ref1)

    # Case 2: ragged batch, class-major input (no wrapper transpose), small tile ->
    # multi-step "parallel" grid with per-tile partial sums, partial last block and
    # last-tile masking all exercised.
    B2 = 4700
    logits2 = 3.0 * jax.random.normal(k3, (B2, NUM_CLASSES), dtype=jnp.float32)
    labels2 = jax.random.randint(k4, (B2,), 0, NUM_CLASSES, dtype=jnp.int32)
    loss2 = jax.block_until_ready(
        taylor_cross_entropy_loss(jnp.transpose(logits2), labels2,
                                  class_major=True, examples_per_tile=1024))
    ref2 = _reference(logits2, labels2)
    assert jnp.allclose(loss2, ref2, atol=1e-5, rtol=1e-4), (loss2, ref2)

    print("KERNEL_OK")
</pallas_src>

<mosaic_0001>
module attributes {stable_mosaic.version = 11 : i64} {
  func.func @_taylor_ce_kernel(%arg0: i32, %arg1: memref<5x1x128xf32, #tpu.memory_space<vmem>>, %arg2: memref<1x128xi32, #tpu.memory_space<vmem>>, %arg3: memref<1x1x128xf32, #tpu.memory_space<vmem>>) attributes {dimension_semantics = [#tpu.dimension_semantics<parallel>], iteration_bounds = array<i64: 1>, scalar_prefetch = 0 : i64, scratch_operands = 0 : i64, tpu.core_type = #tpu.core_type<tc>, window_params = [{transform_indices = @transform_0, window_bounds = array<i64: 5, 1, 128>}, {transform_indices = @transform_1, window_bounds = array<i64: 1, 128>}, {transform_indices = @transform_2, window_bounds = array<i64: 1, 1, 128>}]} {
    %c0 = arith.constant 0 : index
    %c0_0 = arith.constant 0 : index
    %c0_1 = arith.constant 0 : index
    %0 = vector.load %arg1[%c0, %c0_0, %c0_1] : memref<5x1x128xf32, #tpu.memory_space<vmem>>, vector<5x1x128xf32>
    %cst = arith.constant 5.000000e-01 : f32
    %1 = vector.broadcast %cst : f32 to vector<5x1x128xf32>
    %2 = arith.mulf %1, %0 : vector<5x1x128xf32>
    %cst_2 = arith.constant 1.000000e+00 : f32
    %3 = vector.broadcast %cst_2 : f32 to vector<5x1x128xf32>
    %4 = arith.addf %3, %2 : vector<5x1x128xf32>
    %5 = arith.mulf %0, %4 : vector<5x1x128xf32>
    %cst_3 = arith.constant 1.000000e+00 : f32
    %6 = vector.broadcast %cst_3 : f32 to vector<5x1x128xf32>
    %7 = arith.addf %6, %5 : vector<5x1x128xf32>
    %c0_4 = arith.constant 0 : index
    %c0_5 = arith.constant 0 : index
    %8 = vector.load %arg2[%c0_4, %c0_5] : memref<1x128xi32, #tpu.memory_space<vmem>>, vector<1x128xi32>
    %9 = vector.extract_strided_slice %7 {offsets = [0, 0, 0], sizes = [1, 1, 128], strides = [1, 1, 1]} : vector<5x1x128xf32> to vector<1x1x128xf32>
    %10 = vector.shape_cast %9 : vector<1x1x128xf32> to vector<1x128xf32>
    %11 = vector.extract_strided_slice %7 {offsets = [0, 0, 0], sizes = [1, 1, 128], strides = [1, 1, 1]} : vector<5x1x128xf32> to vector<1x1x128xf32>
    %12 = vector.shape_cast %11 : vector<1x1x128xf32> to vector<1x128xf32>
    %13 = vector.extract_strided_slice %7 {offsets = [0, 0, 0], sizes = [1, 1, 128], strides = [1, 1, 1]} : vector<5x1x128xf32> to vector<1x1x128xf32>
    %14 = vector.shape_cast %13 : vector<1x1x128xf32> to vector<1x128xf32>
    %15 = vector.extract_strided_slice %7 {offsets = [1, 0, 0], sizes = [1, 1, 128], strides = [1, 1, 1]} : vector<5x1x128xf32> to vector<1x1x128xf32>
    %16 = vector.shape_cast %15 : vector<1x1x128xf32> to vector<1x128xf32>
    %17 = arith.addf %10, %16 : vector<1x128xf32>
    %18 = arith.mulf %12, %16 : vector<1x128xf32>
    %c1_i32 = arith.constant 1 : i32
    %19 = vector.broadcast %c1_i32 : i32 to vector<1x128xi32>
    %20 = arith.cmpi eq, %8, %19 : vector<1x128xi32>
    %21 = arith.select %20, %16, %14 : vector<1x128xi1>, vector<1x128xf32>
    %22 = vector.extract_strided_slice %7 {offsets = [2, 0, 0], sizes = [1, 1, 128], strides = [1, 1, 1]} : vector<5x1x128xf32> to vector<1x1x128xf32>
    %23 = vector.shape_cast %22 : vector<1x1x128xf32> to vector<1x128xf32>
    %24 = arith.addf %17, %23 : vector<1x128xf32>
    %25 = arith.mulf %18, %23 : vector<1x128xf32>
    %c2_i32 = arith.constant 2 : i32
    %26 = vector.broadcast %c2_i32 : i32 to vector<1x128xi32>
    %27 = arith.cmpi eq, %8, %26 : vector<1x128xi32>
    %28 = arith.select %27, %23, %21 : vector<1x128xi1>, vector<1x128xf32>
    %29 = vector.extract_strided_slice %7 {offsets = [3, 0, 0], sizes = [1, 1, 128], strides = [1, 1, 1]} : vector<5x1x128xf32> to vector<1x1x128xf32>
    %30 = vector.shape_cast %29 : vector<1x1x128xf32> to vector<1x128xf32>
    %31 = arith.addf %24, %30 : vector<1x128xf32>
    %32 = arith.mulf %25, %30 : vector<1x128xf32>
    %c3_i32 = arith.constant 3 : i32
    %33 = vector.broadcast %c3_i32 : i32 to vector<1x128xi32>
    %34 = arith.cmpi eq, %8, %33 : vector<1x128xi32>
    %35 = arith.select %34, %30, %28 : vector<1x128xi1>, vector<1x128xf32>
    %36 = vector.extract_strided_slice %7 {offsets = [4, 0, 0], sizes = [1, 1, 128], strides = [1, 1, 1]} : vector<5x1x128xf32> to vector<1x1x128xf32>
    %37 = vector.shape_cast %36 : vector<1x1x128xf32> to vector<1x128xf32>
    %38 = arith.addf %31, %37 : vector<1x128xf32>
    %39 = arith.mulf %32, %37 : vector<1x128xf32>
    %c4_i32 = arith.constant 4 : i32
    %40 = vector.broadcast %c4_i32 : i32 to vector<1x128xi32>
    %41 = arith.cmpi eq, %8, %40 : vector<1x128xi32>
    %42 = arith.select %41, %37, %35 : vector<1x128xi1>, vector<1x128xf32>
    %43 = math.log %38 : vector<1x128xf32>
    %44 = math.log %39 : vector<1x128xf32>
    %cst_6 = arith.constant 5.000000e-02 : f32
    %45 = vector.broadcast %cst_6 : f32 to vector<1x128xf32>
    %46 = arith.mulf %45, %44 : vector<1x128xf32>
    %47 = arith.subf %43, %46 : vector<1x128xf32>
    %48 = math.log %42 : vector<1x128xf32>
    %cst_7 = arith.constant 7.500000e-01 : f32
    %49 = vector.broadcast %cst_7 : f32 to vector<1x128xf32>
    %50 = arith.mulf %49, %48 : vector<1x128xf32>
    %51 = arith.subf %47, %50 : vector<1x128xf32>
    %c0_i32 = arith.constant 0 : i32
    %52 = arith.cmpi ne, %arg0, %c0_i32 : i32
    %53 = arith.extui %52 : i1 to i32
    %c0_i32_8 = arith.constant 0 : i32
    %54 = arith.cmpi ne, %53, %c0_i32_8 : i32
    scf.if %54 {
      %cst_11 = arith.constant dense<0.000000e+00> : vector<128xf32>
      %58 = vector.multi_reduction <add>, %51, %cst_11 [0] : vector<1x128xf32> to vector<128xf32>
      %59 = vector.shape_cast %58 : vector<128xf32> to vector<1x128xf32>
      %60 = vector.shape_cast %59 : vector<1x128xf32> to vector<1x1x128xf32>
      %c0_12 = arith.constant 0 : index
      %c0_13 = arith.constant 0 : index
      %c0_14 = arith.constant 0 : index
      %61 = vector.load %arg3[%c0_12, %c0_13, %c0_14] : memref<1x1x128xf32, #tpu.memory_space<vmem>>, vector<1x1x128xf32>
      tpu.vector_store %arg3[%c0_12, %c0_13, %c0_14], %60 {strides = array<i32>} : memref<1x1x128xf32, #tpu.memory_space<vmem>>, vector<1x1x128xf32>,
    } else {
    }
    %c0_i32_9 = arith.constant 0 : i32
    %55 = arith.cmpi eq, %arg0, %c0_i32_9 : i32
    %56 = arith.extui %55 : i1 to i32
    %c0_i32_10 = arith.constant 0 : i32
    %57 = arith.cmpi ne, %56, %c0_i32_10 : i32
    scf.if %57 {
      %58 = tpu.iota {dimensions = array<i32: 0>} : vector<1x128xi32>
      %59 = tpu.iota {dimensions = array<i32: 1>} : vector<1x128xi32>
      %c1_i32_11 = arith.constant 1 : i32
      %60 = arith.muli %arg0, %c1_i32_11 : i32
      %61 = vector.broadcast %60 : i32 to vector<1x128xi32>
      %62 = arith.addi %61, %58 : vector<1x128xi32>
      %c128_i32 = arith.constant 128 : i32
      %63 = vector.broadcast %c128_i32 : i32 to vector<1x128xi32>
      %64 = arith.muli %62, %63 : vector<1x128xi32>
      %65 = arith.addi %64, %59 : vector<1x128xi32>
      %c32_i32 = arith.constant 32 : i32
      %66 = vector.broadcast %c32_i32 : i32 to vector<1x128xi32>
      %67 = arith.cmpi slt, %65, %66 : vector<1x128xi32>
      %cst_12 = arith.constant 0.000000e+00 : f32
      %68 = vector.broadcast %cst_12 : f32 to vector<1x128xf32>
      %69 = arith.select %67, %51, %68 : vector<1x128xi1>, vector<1x128xf32>
      %cst_13 = arith.constant dense<0.000000e+00> : vector<128xf32>
      %70 = vector.multi_reduction <add>, %69, %cst_13 [0] : vector<1x128xf32> to vector<128xf32>
      %71 = vector.shape_cast %70 : vector<128xf32> to vector<1x128xf32>
      %72 = vector.shape_cast %71 : vector<1x128xf32> to vector<1x1x128xf32>
      %c0_14 = arith.constant 0 : index
      %c0_15 = arith.constant 0 : index
      %c0_16 = arith.constant 0 : index
      %73 = vector.load %arg3[%c0_14, %c0_15, %c0_16] : memref<1x1x128xf32, #tpu.memory_space<vmem>>, vector<1x1x128xf32>
      tpu.vector_store %arg3[%c0_14, %c0_15, %c0_16], %72 {strides = array<i32>} : memref<1x1x128xf32, #tpu.memory_space<vmem>>, vector<1x1x128xf32>,
    } else {
    }
    return
  }
  func.func @transform_0(%arg0: i32) -> (i32, i32, i32) {
    %c0_i32 = arith.constant 0 : i32
    %c0_i32_0 = arith.constant 0 : i32
    %c0_i32_1 = arith.constant 0 : i32
    return %c0_i32, %arg0, %c0_i32_0 : i32, i32, i32
  }
  func.func @transform_1(%arg0: i32) -> (i32, i32) {
    %c0_i32 = arith.constant 0 : i32
    %c0_i32_0 = arith.constant 0 : i32
    return %arg0, %c0_i32 : i32, i32
  }
  func.func @transform_2(%arg0: i32) -> (i32, i32, i32) {
    %c0_i32 = arith.constant 0 : i32
    %c0_i32_0 = arith.constant 0 : i32
    %c0_i32_1 = arith.constant 0 : i32
    return %arg0, %c0_i32, %c0_i32_0 : i32, i32, i32
  }
}

</mosaic_0001>

<llo_original>
// kernel: tpu_custom_call.1
$region0: #{tpu_custom_call.1}
  #allocation0 [shape = 'u32[]', space=smem, size = 0x4, offset = 0x4, fixed_abs, tag = 'smem constant byte address 0x4 - core index']
  #allocation1 [shape = 'u32[144,128]{1,0:T(1,128)}', space=vmem, size = 0x12000, scoped, tag = 'internal scratch']
  %s0 = inlined_call_operand.hbm [shape: f32[5,1,128], index: 0, kind: input, shape index: {}]
  %s1 = inlined_call_operand.vmem [shape: s32[1,128], index: 1, kind: input, shape index: {}]
  %s2 = inlined_call_operand.hbm [shape: f32[1,1,128], index: 2, kind: output, shape index: {}]
  %s3 = sld [smem:[#allocation0]]
  $region30: #{tpu_custom_call.1} parent=0
    _
  %s5 = ssub.s32 1, %s3
  %s6 = scalar_select 0, %s5, %s3
  $region1: #{tpu_custom_call.1} parent=0
    #allocation2 [shape = 'u8[2560]{0}', space=vmem, size = 0xc00, scoped, tag = 'input window, operand 0, single buffered']
    #allocation3 [shape = 's32[1]{0}', space=sflag, size = 0x4, scoped, tag = 'scoped memory for tpu_custom_call.1']
    #allocation4 [shape = 's32[1]{0}', space=sflag, size = 0x4, scoped, tag = 'scoped memory for tpu_custom_call.1']
    #allocation5 [shape = 'u8[512]{0}', space=vmem, size = 0x400, scoped, tag = 'output window, operand 0, single buffered']
    %7 = vsyncpa [#allocation3], 0
    %8 = vsyncpa [#allocation4], 0
    // Predicated region
    $region2: #{tpu_custom_call.1} parent=1 // pred_check
      _
    $region3: #{tpu_custom_call.1} parent=1 // pred_check_branch
      %10 = sbr.rel (0) target = $region5
    $region4: #{tpu_custom_call.1} parent=1 // pred_region
      %s12 = ssub.s32 80, 80
      %13 = vsyncadd [#allocation3], %s12
      %s14 = sshll.u32 [#allocation2], 4
      %s15 = int_to_ptr.vmem [resolvable:$true] %s14
      %20 = dma.hbm_to_vmem [thread:$0]  %s0, 80, %s15, [#allocation3], 16, 16, 1
    $region5: #{tpu_custom_call.1} parent=1 // pred_fallthru
      _
    // Predicated region
    $region6: #{tpu_custom_call.1} parent=1 // pred_check
      _
    $region7: #{tpu_custom_call.1} parent=1 // pred_check_branch
      %22 = sbr.rel (0) target = $region9
    $region8: #{tpu_custom_call.1} parent=1 // pred_region
      _
    $region9: #{tpu_custom_call.1} parent=1 // pred_fallthru
      _
    // Predicated region
    $region10: #{tpu_custom_call.1} parent=1 // pred_check
      _
    $region11: #{tpu_custom_call.1} parent=1 // pred_check_branch
      %24 = sbr.rel (0) target = $region13
    $region12: #{tpu_custom_call.1} parent=1 // pred_region
      %25 = dma.done [#allocation3], 80
    $region13: #{tpu_custom_call.1} parent=1 // pred_fallthru
      _
    %v26 = vld [vmem:[#allocation2] sm:$0x1]
    %v27 = vld [vmem:[#allocation2 + $0x1] sm:$0x1]
    %v28 = vld [vmem:[#allocation2 + $0x2] sm:$0x1]
    %v29 = vld [vmem:[#allocation2 + $0x3] sm:$0x1]
    %v30 = vld [vmem:[#allocation2 + $0x4] sm:$0x1]
    %v31 = vmul.f32 %v26, 0.5
    %v32 = vmul.f32 %v27, 0.5
    %v33 = vmul.f32 %v28, 0.5
    %v34 = vmul.f32 %v29, 0.5
    %v35 = vmul.f32 %v30, 0.5
    %v36 = vadd.f32 %v31, 1.0
    %v37 = vadd.f32 %v32, 1.0
    %v38 = vadd.f32 %v33, 1.0
    %v39 = vadd.f32 %v34, 1.0
    %v40 = vadd.f32 %v35, 1.0
    %v41 = vmul.f32 %v26, %v36
    %v42 = vmul.f32 %v27, %v37
    %v43 = vmul.f32 %v28, %v38
    %v44 = vmul.f32 %v29, %v39
    %v45 = vmul.f32 %v30, %v40
    %v46 = vadd.f32 %v41, 1.0
    %v47 = vadd.f32 %v42, 1.0
    %v48 = vadd.f32 %v43, 1.0
    %v49 = vadd.f32 %v44, 1.0
    %v50 = vadd.f32 %v45, 1.0
    %v51 = vld [vmem:[%s1] sm:$0x1]
    %v52 = vadd.f32 %v46, %v47
    %v53 = vmul.f32 %v46, %v47
    %vm54 = vcmp.eq.s32.totalorder %v51, 1
    %v55 = vsel %vm54, %v47, %v46
    %v56 = vadd.f32 %v52, %v48
    %v57 = vmul.f32 %v53, %v48
    %vm58 = vcmp.eq.s32.totalorder %v51, 2
    %v59 = vsel %vm58, %v48, %v55
    %v60 = vadd.f32 %v56, %v49
    %v61 = vmul.f32 %v57, %v49
    %vm62 = vcmp.eq.s32.totalorder %v51, 3
    %v63 = vsel %vm62, %v49, %v59
    %v64 = vadd.f32 %v60, %v50
    %v65 = vmul.f32 %v61, %v50
    %vm66 = vcmp.eq.s32.totalorder %v51, 4
    %v67 = vsel %vm66, %v50, %v63
    %v68 = vlog2.pop %v64
    %v69 = vmul.f32 %v68, 0.6931472
    %v70 = vlog2.pop %v65
    %v71 = vmul.f32 %v70, 0.6931472
    %v72 = vmul.f32 %v71, 0.05
    %v73 = vsub.f32 %v69, %v72
    %v74 = vlog2.pop %v67
    %v75 = vmul.f32 %v74, 0.6931472
    %v76 = vmul.f32 %v75, 0.75
    %v77 = vsub.f32 %v73, %v76
    %p78 = scmp.ne.s32.totalorder 0, 0
    // Predicated region
    $region14: #{tpu_custom_call.1} parent=1 // pred_check
      %p79 = pneg %p78
    $region15: #{tpu_custom_call.1} parent=1 // pred_check_branch
      %81 = sbr.rel (%p79) target = $region17
    $region16: #{tpu_custom_call.1} parent=1 // pred_region
      %v82 = vadd.f32 %v77, 0.0
      %83 = vst [vmem:[#allocation5] sm:$0x1] %v82
    $region17: #{tpu_custom_call.1} parent=1 // pred_fallthru
      _
    %p84 = scmp.eq.s32.totalorder 0, 0
    // Predicated region
    $region18: #{tpu_custom_call.1} parent=1 // pred_check
      %p85 = pneg %p84
    $region19: #{tpu_custom_call.1} parent=1 // pred_check_branch
      %87 = sbr.rel (%p85) target = $region21
    $region20: #{tpu_custom_call.1} parent=1 // pred_region
      %v88 = vlaneseq
      %v89 = vshrl.u32 %v88, 7
      %v90 = vlaneseq
      %v91 = vand.u32 %v90, 127
      %v92 = vstv 0
      %v93 = vadd.s32 %v92, %v89
      %v94 = vmul.u32 %v93, 128
      %v95 = vadd.s32 %v94, %v91
      %vm96 = vcmp.lt.s32.totalorder %v95, 32
      %v97 = vsel %vm96, %v77, 0.0
      %v98 = vadd.f32 %v97, 0.0
      %99 = vst [vmem:[#allocation5] sm:$0x1] %v98
    $region21: #{tpu_custom_call.1} parent=1 // pred_fallthru
      _
    // Predicated region
    $region22: #{tpu_custom_call.1} parent=1 // pred_check
      _
    $region23: #{tpu_custom_call.1} parent=1 // pred_check_branch
      %101 = sbr.rel (0) target = $region25
    $region24: #{tpu_custom_call.1} parent=1 // pred_region
      %s103 = ssub.s32 16, 16
      %104 = vsyncadd [#allocation4], %s103
      %s106 = sshll.u32 [#allocation5], 4
      %s107 = int_to_ptr.vmem [resolvable:$true] %s106
      %109 = dma.vmem_to_hbm [thread:$0]  %s107, 16, %s2, [#allocation4]
    $region25: #{tpu_custom_call.1} parent=1 // pred_fallthru
      _
    // Predicated region
    $region26: #{tpu_custom_call.1} parent=1 // pred_check
      _
    $region27: #{tpu_custom_call.1} parent=1 // pred_check_branch
      %111 = sbr.rel (0) target = $region29
    $region28: #{tpu_custom_call.1} parent=1 // pred_region
      %112 = dma.done [#allocation4], 16
    $region29: #{tpu_custom_call.1} parent=1 // pred_fallthru
      _
    %113 = vsyncpa [#allocation3], 1
    %114 = vsyncpa [#allocation4], 1

</llo_original>
